<compile_context>
chip_gen: v7x
topology: tpu7x:2x2x1
jax: 0.10.0
libtpu: 0.0.40
codegen_flags: <defaults>
</compile_context>

<pallas_src>
import functools

import jax
import jax.numpy as jnp
from jax import lax
from jax.experimental import pallas as pl
from jax.experimental.pallas import tpu as pltpu


def _triplet_hardest_kernel(t_col_ref, t_row_ref, sq_col_ref, sq_row_ref,
                            x_row_ref, xT_col_ref, o_ref,
                            max_ref, min_ref, *, margin, lane_groups):
    j = pl.program_id(1)
    neg_inf = jnp.float32(-jnp.inf)
    pos_inf = jnp.float32(jnp.inf)

    @pl.when(j == 0)
    def _init():
        max_ref[...] = jnp.full(max_ref.shape, neg_inf, jnp.float32)
        min_ref[...] = jnp.full(min_ref.shape, pos_inf, jnp.float32)

    xi = x_row_ref[...]                        # (TM, d)   bf16 (or f32)
    xjt = xT_col_ref[...]                      # (d, TN)   pre-transposed column operand

    # Canonical (TM,K)@(K,TN) MXU matmul, f32 accumulation: gram[a,b] = <x_i[a], x_j[b]>.
    gram = lax.dot_general(
        xi, xjt,
        dimension_numbers=(((1,), (0,)), ((), ())),
        preferred_element_type=jnp.float32)    # (TM, TN)

    # partial[a,b] = 0.5*||x_j[b]||^2 - <x_i[a], x_j[b]>.
    # The 0.5*||x_i||^2 term is constant along b and the global factor of 2 is monotone,
    # so both are applied only after the max/min reductions (finalize).
    partial = sq_row_ref[...] - gram           # (1,TN) broadcast against (TM,TN)

    same = t_col_ref[...] == t_row_ref[...]    # (TM,1) == (1,TN) -> (TM,TN) bool
    masked_ap = jnp.where(same, partial, neg_inf)   # candidates for hardest positive
    masked_an = jnp.where(same, pos_inf, partial)   # candidates for hardest negative

    # Lane-group tree reduce on the VPU only: (TM,TN) -> (TM,128).  Static 128-aligned slices
    # are zero-cost vreg views; maxima/minima between vregs are plain VALU ops.
    gm = masked_ap[:, 0:128]
    gn = masked_an[:, 0:128]
    for g in range(1, lane_groups):
        lo = g * 128
        gm = jnp.maximum(gm, masked_ap[:, lo:lo + 128])
        gn = jnp.minimum(gn, masked_an[:, lo:lo + 128])
    max_ref[...] = jnp.maximum(max_ref[...], gm)
    min_ref[...] = jnp.minimum(min_ref[...], gn)

    @pl.when(j == pl.num_programs(1) - 1)
    def _finalize():
        sq_i_half = sq_col_ref[...]            # (TM, 1) f32, 0.5*||x_i||^2
        eps = jnp.float32(1e-12)
        # Single cross-lane reduce per row block; sqrt deferred past the reductions
        # (sqrt / clamp / *2 are monotone, so results match the reference).
        ap2 = 2.0 * (jnp.max(max_ref[...], axis=-1, keepdims=True) + sq_i_half)
        an2 = 2.0 * (jnp.min(min_ref[...], axis=-1, keepdims=True) + sq_i_half)
        dist_ap = jnp.sqrt(jnp.maximum(ap2, eps))
        dist_an = jnp.sqrt(jnp.maximum(an2, eps))
        hinge = jnp.maximum(dist_ap - dist_an + jnp.float32(margin), 0.0)
        o_ref[...] = hinge.astype(o_ref.dtype)


def _pick_tile(n, align, cap):
    """Largest multiple of `align` that divides n and is <= cap (n is always align-friendly)."""
    best = None
    t = align
    limit = min(n, cap)
    while t <= limit:
        if n % t == 0:
            best = t
        t += align
    return best if best is not None else n


def triplet_hardest_loss(inputs, targets, margin=0.3, compute_dtype=jnp.bfloat16):
    """inputs: (n, feat_dim) float, targets: (n,) int labels. Returns scalar loss (f32)."""
    n, d = inputs.shape
    n_pad = ((n + 127) // 128) * 128           # lane-align the batch; padded rows masked out

    # ---- tile selection under an explicit VMEM budget (safe for v7x 64 MiB/TC) ----
    bytes_x = jnp.dtype(compute_dtype).itemsize

    def vmem_estimate(tm_, tn_):
        x_tiles = 2 * tm_ * d * bytes_x + 2 * d * tn_ * bytes_x   # double-buffered x / xT
        small = 2 * (tm_ + tn_) * 8                               # labels + half-norm tiles
        out = 2 * tm_ * 4
        scratch = 2 * tm_ * 128 * 4
        temps = 4 * tm_ * tn_ * 4                                 # gram/partial/masked f32 temps
        return x_tiles + small + out + scratch + temps

    tm = _pick_tile(n_pad, 8, 512)             # row tile (sublane-aligned)
    tn = _pick_tile(n_pad, 128, 1024)          # column tile (lane-aligned)
    budget = 28 * 1024 * 1024
    while vmem_estimate(tm, tn) > budget and tn > 128:
        tn = _pick_tile(n_pad, 128, tn - 128)
    while vmem_estimate(tm, tn) > budget and tm > 8:
        tm = _pick_tile(n_pad, 8, tm - 8)

    # ---- operand preparation (one-time, wrapper side) ----
    x = inputs.astype(compute_dtype)
    xc = x.astype(jnp.float32)
    sq_half = 0.5 * jnp.sum(xc * xc, axis=1, keepdims=True)       # (n, 1) f32, 0.5*||x||^2

    pad = n_pad - n
    t = targets.astype(jnp.int32)
    if pad:
        x = jnp.pad(x, ((0, pad), (0, 0)))                        # zero features
        sq_half = jnp.pad(sq_half, ((0, pad), (0, 0)),
                          constant_values=jnp.inf)                # +inf -> never the min
        # Sentinel class: padded columns are never "same" as a real row -> never the max.
        # TODO(synk): assumes no real label equals INT32_MIN (standard class ids are >= 0).
        t = jnp.pad(t, (0, pad), constant_values=jnp.iinfo(jnp.int32).min)

    xT = x.T                                   # (d, n_pad): canonical RHS, no in-kernel vxpose
    sq_col = sq_half                           # (n_pad, 1)
    sq_row = sq_half.reshape(1, n_pad)
    t_col = t.reshape(n_pad, 1)
    t_row = t.reshape(1, n_pad)

    kernel = functools.partial(_triplet_hardest_kernel,
                               margin=float(margin), lane_groups=tn // 128)

    hinge = pl.pallas_call(
        kernel,
        out_shape=jax.ShapeDtypeStruct((n_pad, 1), jnp.float32),
        grid_spec=pltpu.PrefetchScalarGridSpec(
            num_scalar_prefetch=0,
            grid=(n_pad // tm, n_pad // tn),
            in_specs=[
                pl.BlockSpec((tm, 1), lambda i, j: (i, 0)),   # labels, row tile
                pl.BlockSpec((1, tn), lambda i, j: (0, j)),   # labels, column tile
                pl.BlockSpec((tm, 1), lambda i, j: (i, 0)),   # 0.5*||x_i||^2
                pl.BlockSpec((1, tn), lambda i, j: (0, j)),   # 0.5*||x_j||^2
                pl.BlockSpec((tm, d), lambda i, j: (i, 0)),   # x row tile
                pl.BlockSpec((d, tn), lambda i, j: (0, j)),   # x^T column tile
            ],
            out_specs=pl.BlockSpec((tm, 1), lambda i, j: (i, 0)),
            scratch_shapes=[pltpu.VMEM((tm, 128), jnp.float32),   # running hardest positive
                            pltpu.VMEM((tm, 128), jnp.float32)],  # running hardest negative
        ),
        compiler_params=pltpu.CompilerParams(
            dimension_semantics=("parallel", "arbitrary"),
            vmem_limit_bytes=48 * 1024 * 1024),
    )(t_col, t_row, sq_col, sq_row, x, xT)

    # Final mean over the n real rows happens here: a cross-row-block scalar accumulator inside
    # the kernel would race once the "parallel" row axis is sharded across TensorCores, and this
    # reduction is negligible work.  jnp.where also shields the padded rows' inf/nan values.
    valid = (jnp.arange(n_pad) < n).reshape(n_pad, 1)
    return jnp.sum(jnp.where(valid, hinge, 0.0)) / jnp.float32(n)


def _reference_loss(inputs, targets, margin=0.3):
    # Pure-JAX reference mirroring the PyTorch forward.
    sq = jnp.sum(inputs * inputs, axis=1, keepdims=True)
    gram = jnp.matmul(inputs, inputs.T, precision=lax.Precision.HIGHEST)
    dist = jnp.sqrt(jnp.maximum(sq + sq.T - 2.0 * gram, 1e-12))
    mask = targets[:, None] == targets[None, :]
    dist_ap = jnp.max(jnp.where(mask, dist, -jnp.inf), axis=1)
    dist_an = jnp.min(jnp.where(mask, jnp.inf, dist), axis=1)
    return jnp.mean(jnp.maximum(dist_ap - dist_an + margin, 0.0))


if __name__ == "__main__":
    key = jax.random.PRNGKey(0)
    n, d = 8, 32                     # batch of 8 embeddings, 32-d features
    inputs = jax.random.normal(key, (n, d), dtype=jnp.float32)
    # 4 classes, 2 samples each -> every row has a non-self positive and negatives.
    targets = jnp.array([0, 0, 1, 1, 2, 2, 3, 3], dtype=jnp.int32)

    # Default (bf16 Gram) path: compare against the f32 reference evaluated on the same
    # bf16-rounded embeddings (the only rounding the kernel introduces).
    loss_bf16 = jax.block_until_ready(triplet_hardest_loss(inputs, targets, margin=0.3))
    x_rounded = inputs.astype(jnp.bfloat16).astype(jnp.float32)
    ref_bf16 = _reference_loss(x_rounded, targets, margin=0.3)
    assert jnp.allclose(loss_bf16, ref_bf16, atol=1e-3, rtol=1e-3), (loss_bf16, ref_bf16)

    # Full-f32 path: matches the f32 reference directly.
    loss_f32 = jax.block_until_ready(
        triplet_hardest_loss(inputs, targets, margin=0.3, compute_dtype=jnp.float32))
    ref_f32 = _reference_loss(inputs, targets, margin=0.3)
    assert jnp.allclose(loss_f32, ref_f32, atol=1e-3, rtol=1e-3), (loss_f32, ref_f32)

    print("KERNEL_OK")
</pallas_src>

<mosaic_0001>
module attributes {stable_mosaic.version = 11 : i64} {
  func.func @_triplet_hardest_kernel(%arg0: i32, %arg1: i32, %arg2: memref<128x1xi32, #tpu.memory_space<vmem>>, %arg3: memref<1x128xi32, #tpu.memory_space<vmem>>, %arg4: memref<128x1xf32, #tpu.memory_space<vmem>>, %arg5: memref<1x128xf32, #tpu.memory_space<vmem>>, %arg6: memref<128x32xbf16, #tpu.memory_space<vmem>>, %arg7: memref<32x128xbf16, #tpu.memory_space<vmem>>, %arg8: memref<128x1xf32, #tpu.memory_space<vmem>>, %arg9: memref<128x128xf32, #tpu.memory_space<vmem>>, %arg10: memref<128x128xf32, #tpu.memory_space<vmem>>) attributes {dimension_semantics = [#tpu.dimension_semantics<parallel>, #tpu.dimension_semantics<arbitrary>], iteration_bounds = array<i64: 1, 1>, scalar_prefetch = 0 : i64, scratch_operands = 2 : i64, tpu.core_type = #tpu.core_type<tc>, window_params = [{transform_indices = @transform_0, window_bounds = array<i64: 128, 1>}, {transform_indices = @transform_1, window_bounds = array<i64: 1, 128>}, {transform_indices = @transform_2, window_bounds = array<i64: 128, 1>}, {transform_indices = @transform_3, window_bounds = array<i64: 1, 128>}, {transform_indices = @transform_4, window_bounds = array<i64: 128, 32>}, {transform_indices = @transform_5, window_bounds = array<i64: 32, 128>}, {transform_indices = @transform_6, window_bounds = array<i64: 128, 1>}]} {
    %c0_i32 = arith.constant 0 : i32
    %0 = arith.cmpi eq, %arg1, %c0_i32 : i32
    %1 = arith.extui %0 : i1 to i32
    %cst = arith.constant 0xFF800000 : f32
    %cst_0 = arith.constant 0x7F800000 : f32
    %c0_i32_1 = arith.constant 0 : i32
    %2 = arith.cmpi ne, %1, %c0_i32_1 : i32
    scf.if %2 {
      %27 = vector.broadcast %cst : f32 to vector<128x128xf32>
      %c0_24 = arith.constant 0 : index
      %c0_25 = arith.constant 0 : index
      %28 = vector.load %arg9[%c0_24, %c0_25] : memref<128x128xf32, #tpu.memory_space<vmem>>, vector<128x128xf32>
      tpu.vector_store %arg9[%c0_24, %c0_25], %27 {strides = array<i32>} : memref<128x128xf32, #tpu.memory_space<vmem>>, vector<128x128xf32>,
      %29 = vector.broadcast %cst_0 : f32 to vector<128x128xf32>
      %c0_26 = arith.constant 0 : index
      %c0_27 = arith.constant 0 : index
      %30 = vector.load %arg10[%c0_26, %c0_27] : memref<128x128xf32, #tpu.memory_space<vmem>>, vector<128x128xf32>
      tpu.vector_store %arg10[%c0_26, %c0_27], %29 {strides = array<i32>} : memref<128x128xf32, #tpu.memory_space<vmem>>, vector<128x128xf32>,
    } else {
    }
    %c0 = arith.constant 0 : index
    %c0_2 = arith.constant 0 : index
    %3 = vector.load %arg6[%c0, %c0_2] : memref<128x32xbf16, #tpu.memory_space<vmem>>, vector<128x32xbf16>
    %c0_3 = arith.constant 0 : index
    %c0_4 = arith.constant 0 : index
    %4 = vector.load %arg7[%c0_3, %c0_4] : memref<32x128xbf16, #tpu.memory_space<vmem>>, vector<32x128xbf16>
    %cst_5 = arith.constant dense<0.000000e+00> : vector<128x128xf32>
    %5 = tpu.matmul %3, %4, %cst_5 {dimension_numbers = #tpu.dot_dimension_numbers<[1], [0], [0], [1], [0, 0, 1, 1], [], []>} : vector<128x32xbf16>, vector<32x128xbf16>, vector<128x128xf32> -> vector<128x128xf32>
    %c0_6 = arith.constant 0 : index
    %c0_7 = arith.constant 0 : index
    %6 = vector.load %arg5[%c0_6, %c0_7] : memref<1x128xf32, #tpu.memory_space<vmem>>, vector<1x128xf32>
    %7 = vector.broadcast %6 : vector<1x128xf32> to vector<128x128xf32>
    %8 = arith.subf %7, %5 : vector<128x128xf32>
    %c0_8 = arith.constant 0 : index
    %c0_9 = arith.constant 0 : index
    %9 = vector.load %arg2[%c0_8, %c0_9] : memref<128x1xi32, #tpu.memory_space<vmem>>, vector<128x1xi32>
    %c0_10 = arith.constant 0 : index
    %c0_11 = arith.constant 0 : index
    %10 = vector.load %arg3[%c0_10, %c0_11] : memref<1x128xi32, #tpu.memory_space<vmem>>, vector<1x128xi32>
    %11 = vector.broadcast %9 : vector<128x1xi32> to vector<128x128xi32>
    %12 = vector.broadcast %10 : vector<1x128xi32> to vector<128x128xi32>
    %13 = arith.cmpi eq, %11, %12 : vector<128x128xi32>
    %cst_12 = arith.constant 0xFF800000 : f32
    %14 = vector.broadcast %cst_12 : f32 to vector<128x128xf32>
    %15 = arith.select %13, %8, %14 : vector<128x128xi1>, vector<128x128xf32>
    %cst_13 = arith.constant 0x7F800000 : f32
    %16 = vector.broadcast %cst_13 : f32 to vector<128x128xf32>
    %17 = arith.select %13, %16, %8 : vector<128x128xi1>, vector<128x128xf32>
    %c0_14 = arith.constant 0 : index
    %c0_15 = arith.constant 0 : index
    %18 = vector.load %arg9[%c0_14, %c0_15] : memref<128x128xf32, #tpu.memory_space<vmem>>, vector<128x128xf32>
    %19 = arith.maximumf %18, %15 : vector<128x128xf32>
    %c0_16 = arith.constant 0 : index
    %c0_17 = arith.constant 0 : index
    %20 = vector.load %arg9[%c0_16, %c0_17] : memref<128x128xf32, #tpu.memory_space<vmem>>, vector<128x128xf32>
    tpu.vector_store %arg9[%c0_16, %c0_17], %19 {strides = array<i32>} : memref<128x128xf32, #tpu.memory_space<vmem>>, vector<128x128xf32>,
    %c0_18 = arith.constant 0 : index
    %c0_19 = arith.constant 0 : index
    %21 = vector.load %arg10[%c0_18, %c0_19] : memref<128x128xf32, #tpu.memory_space<vmem>>, vector<128x128xf32>
    %22 = arith.minimumf %21, %17 : vector<128x128xf32>
    %c0_20 = arith.constant 0 : index
    %c0_21 = arith.constant 0 : index
    %23 = vector.load %arg10[%c0_20, %c0_21] : memref<128x128xf32, #tpu.memory_space<vmem>>, vector<128x128xf32>
    tpu.vector_store %arg10[%c0_20, %c0_21], %22 {strides = array<i32>} : memref<128x128xf32, #tpu.memory_space<vmem>>, vector<128x128xf32>,
    %c0_i32_22 = arith.constant 0 : i32
    %24 = arith.cmpi eq, %arg1, %c0_i32_22 : i32
    %25 = arith.extui %24 : i1 to i32
    %c0_i32_23 = arith.constant 0 : i32
    %26 = arith.cmpi ne, %25, %c0_i32_23 : i32
    scf.if %26 {
      %c0_24 = arith.constant 0 : index
      %c0_25 = arith.constant 0 : index
      %27 = vector.load %arg4[%c0_24, %c0_25] : memref<128x1xf32, #tpu.memory_space<vmem>>, vector<128x1xf32>
      %c0_26 = arith.constant 0 : index
      %c0_27 = arith.constant 0 : index
      %28 = vector.load %arg9[%c0_26, %c0_27] : memref<128x128xf32, #tpu.memory_space<vmem>>, vector<128x128xf32>
      %cst_28 = arith.constant dense<0xFF800000> : vector<128xf32>
      %29 = vector.multi_reduction <maximumf>, %28, %cst_28 [1] : vector<128x128xf32> to vector<128xf32>
      %30 = vector.shape_cast %29 : vector<128xf32> to vector<128x1xf32>
      %31 = arith.addf %30, %27 : vector<128x1xf32>
      %cst_29 = arith.constant 2.000000e+00 : f32
      %32 = vector.broadcast %cst_29 : f32 to vector<128x1xf32>
      %33 = arith.mulf %32, %31 : vector<128x1xf32>
      %c0_30 = arith.constant 0 : index
      %c0_31 = arith.constant 0 : index
      %34 = vector.load %arg10[%c0_30, %c0_31] : memref<128x128xf32, #tpu.memory_space<vmem>>, vector<128x128xf32>
      %cst_32 = arith.constant dense<0x7F800000> : vector<128xf32>
      %35 = vector.multi_reduction <minimumf>, %34, %cst_32 [1] : vector<128x128xf32> to vector<128xf32>
      %36 = vector.shape_cast %35 : vector<128xf32> to vector<128x1xf32>
      %37 = arith.addf %36, %27 : vector<128x1xf32>
      %cst_33 = arith.constant 2.000000e+00 : f32
      %38 = vector.broadcast %cst_33 : f32 to vector<128x1xf32>
      %39 = arith.mulf %38, %37 : vector<128x1xf32>
      %cst_34 = arith.constant 9.99999996E-13 : f32
      %40 = vector.broadcast %cst_34 : f32 to vector<128x1xf32>
      %41 = arith.maximumf %33, %40 : vector<128x1xf32>
      %42 = math.sqrt %41 : vector<128x1xf32>
      %cst_35 = arith.constant 9.99999996E-13 : f32
      %43 = vector.broadcast %cst_35 : f32 to vector<128x1xf32>
      %44 = arith.maximumf %39, %43 : vector<128x1xf32>
      %45 = math.sqrt %44 : vector<128x1xf32>
      %46 = arith.subf %42, %45 : vector<128x1xf32>
      %cst_36 = arith.constant 3.000000e-01 : f32
      %47 = vector.broadcast %cst_36 : f32 to vector<128x1xf32>
      %48 = arith.addf %46, %47 : vector<128x1xf32>
      %cst_37 = arith.constant 0.000000e+00 : f32
      %49 = vector.broadcast %cst_37 : f32 to vector<128x1xf32>
      %50 = arith.maximumf %48, %49 : vector<128x1xf32>
      %c0_38 = arith.constant 0 : index
      %c0_39 = arith.constant 0 : index
      %51 = vector.load %arg8[%c0_38, %c0_39] : memref<128x1xf32, #tpu.memory_space<vmem>>, vector<128x1xf32>
      tpu.vector_store %arg8[%c0_38, %c0_39], %50 {strides = array<i32>} : memref<128x1xf32, #tpu.memory_space<vmem>>, vector<128x1xf32>,
    } else {
    }
    return
  }
  func.func @transform_0(%arg0: i32, %arg1: i32) -> (i32, i32) {
    %c0_i32 = arith.constant 0 : i32
    %c0_i32_0 = arith.constant 0 : i32
    return %arg0, %c0_i32 : i32, i32
  }
  func.func @transform_1(%arg0: i32, %arg1: i32) -> (i32, i32) {
    %c0_i32 = arith.constant 0 : i32
    %c0_i32_0 = arith.constant 0 : i32
    return %c0_i32, %arg1 : i32, i32
  }
  func.func @transform_2(%arg0: i32, %arg1: i32) -> (i32, i32) {
    %c0_i32 = arith.constant 0 : i32
    %c0_i32_0 = arith.constant 0 : i32
    return %arg0, %c0_i32 : i32, i32
  }
  func.func @transform_3(%arg0: i32, %arg1: i32) -> (i32, i32) {
    %c0_i32 = arith.constant 0 : i32
    %c0_i32_0 = arith.constant 0 : i32
    return %c0_i32, %arg1 : i32, i32
  }
  func.func @transform_4(%arg0: i32, %arg1: i32) -> (i32, i32) {
    %c0_i32 = arith.constant 0 : i32
    %c0_i32_0 = arith.constant 0 : i32
    return %arg0, %c0_i32 : i32, i32
  }
  func.func @transform_5(%arg0: i32, %arg1: i32) -> (i32, i32) {
    %c0_i32 = arith.constant 0 : i32
    %c0_i32_0 = arith.constant 0 : i32
    return %c0_i32, %arg1 : i32, i32
  }
  func.func @transform_6(%arg0: i32, %arg1: i32) -> (i32, i32) {
    %c0_i32 = arith.constant 0 : i32
    %c0_i32_0 = arith.constant 0 : i32
    return %arg0, %c0_i32 : i32, i32
  }
}

</mosaic_0001>

<llo_original>
// kernel: tpu_custom_call.1
$region0: #{tpu_custom_call.1}
  #allocation0 [shape = 'u32[]', space=smem, size = 0x4, offset = 0x4, fixed_abs, tag = 'smem constant byte address 0x4 - core index']
  #allocation1 [shape = 'u32[144,128]{1,0:T(1,128)}', space=vmem, size = 0x12000, scoped, tag = 'internal scratch']
  #allocation2 [shape = 'f32[128,128]{1,0:T(8,128)}', space=vmem, size = 0x10000, scoped, tag = 'scratch operand']
  #allocation3 [shape = 'f32[128,128]{1,0:T(8,128)}', space=vmem, size = 0x10000, scoped, tag = 'scratch operand']
  %s0 = inlined_call_operand.vmem [shape: s32[128,1], index: 0, kind: input, shape index: {}]
  %s1 = inlined_call_operand.vmem [shape: s32[1,128], index: 1, kind: input, shape index: {}]
  %s2 = inlined_call_operand.vmem [shape: f32[128,1], index: 2, kind: input, shape index: {}]
  %s3 = inlined_call_operand.vmem [shape: f32[1,128], index: 3, kind: input, shape index: {}]
  %s4 = inlined_call_operand.vmem [shape: bf16[128,32], index: 4, kind: input, shape index: {}]
  %s5 = inlined_call_operand.vmem [shape: bf16[32,128], index: 5, kind: input, shape index: {}]
  %s6 = inlined_call_operand.vmem [shape: f32[128,1], index: 6, kind: output, shape index: {}]
  %s7 = sld [smem:[#allocation0]]
  $region42: #{tpu_custom_call.1} parent=0
    _
  %s9 = ssub.s32 1, %s7
  %s10 = scalar_select 0, %s9, %s7
  // Predicated region
  $region2: #{tpu_custom_call.1} parent=0 // pred_check
    _
  $region3: #{tpu_custom_call.1} parent=0 // pred_check_branch
    %12 = sbr.rel (0) target = $region5
  $region4: #{tpu_custom_call.1} parent=0 // pred_region
    _
  $region5: #{tpu_custom_call.1} parent=0 // pred_fallthru
    _
  // Predicated region
  $region6: #{tpu_custom_call.1} parent=0 // pred_check
    _
  $region7: #{tpu_custom_call.1} parent=0 // pred_check_branch
    %14 = sbr.rel (0) target = $region9
  $region8: #{tpu_custom_call.1} parent=0 // pred_region
    _
  $region9: #{tpu_custom_call.1} parent=0 // pred_fallthru
    _
  // Predicated region
  $region10: #{tpu_custom_call.1} parent=0 // pred_check
    _
  $region11: #{tpu_custom_call.1} parent=0 // pred_check_branch
    %16 = sbr.rel (0) target = $region13
  $region12: #{tpu_custom_call.1} parent=0 // pred_region
    _
  $region13: #{tpu_custom_call.1} parent=0 // pred_fallthru
    _
  // Predicated region
  $region14: #{tpu_custom_call.1} parent=0 // pred_check
    _
  $region15: #{tpu_custom_call.1} parent=0 // pred_check_branch
    %18 = sbr.rel (0) target = $region17
  $region16: #{tpu_custom_call.1} parent=0 // pred_region
    _
  $region17: #{tpu_custom_call.1} parent=0 // pred_fallthru
    _
  // Predicated region
  $region18: #{tpu_custom_call.1} parent=0 // pred_check
    _
  $region19: #{tpu_custom_call.1} parent=0 // pred_check_branch
    %20 = sbr.rel (0) target = $region21
  $region20: #{tpu_custom_call.1} parent=0 // pred_region
    _
  $region21: #{tpu_custom_call.1} parent=0 // pred_fallthru
    _
  // Predicated region
  $region22: #{tpu_custom_call.1} parent=0 // pred_check
    _
  $region23: #{tpu_custom_call.1} parent=0 // pred_check_branch
    %22 = sbr.rel (0) target = $region25
  $region24: #{tpu_custom_call.1} parent=0 // pred_region
    _
  $region25: #{tpu_custom_call.1} parent=0 // pred_fallthru
    _
  %p24 = scmp.eq.s32.totalorder 0, 0
  // Predicated region
  $region26: #{tpu_custom_call.1} parent=0 // pred_check
    %p25 = pneg %p24
  $region27: #{tpu_custom_call.1} parent=0 // pred_check_branch
    %27 = sbr.rel (%p25) target = $region29
  $region28: #{tpu_custom_call.1} parent=0 // pred_region
    %28 = vst [vmem:[#allocation2] sm:$0xff] -inf
    %29 = vst [vmem:[#allocation2 + $0x8] sm:$0xff] -inf
    %30 = vst [vmem:[#allocation2 + $0x10] sm:$0xff] -inf
    %31 = vst [vmem:[#allocation2 + $0x18] sm:$0xff] -inf
    %32 = vst [vmem:[#allocation2 + $0x20] sm:$0xff] -inf
    %33 = vst [vmem:[#allocation2 + $0x28] sm:$0xff] -inf
    %34 = vst [vmem:[#allocation2 + $0x30] sm:$0xff] -inf
    %35 = vst [vmem:[#allocation2 + $0x38] sm:$0xff] -inf
    %36 = vst [vmem:[#allocation2 + $0x40] sm:$0xff] -inf
    %37 = vst [vmem:[#allocation2 + $0x48] sm:$0xff] -inf
    %38 = vst [vmem:[#allocation2 + $0x50] sm:$0xff] -inf
    %39 = vst [vmem:[#allocation2 + $0x58] sm:$0xff] -inf
    %40 = vst [vmem:[#allocation2 + $0x60] sm:$0xff] -inf
    %41 = vst [vmem:[#allocation2 + $0x68] sm:$0xff] -inf
    %42 = vst [vmem:[#allocation2 + $0x70] sm:$0xff] -inf
    %43 = vst [vmem:[#allocation2 + $0x78] sm:$0xff] -inf
    %44 = vst [vmem:[#allocation3] sm:$0xff] inf
    %45 = vst [vmem:[#allocation3 + $0x8] sm:$0xff] inf
    %46 = vst [vmem:[#allocation3 + $0x10] sm:$0xff] inf
    %47 = vst [vmem:[#allocation3 + $0x18] sm:$0xff] inf
    %48 = vst [vmem:[#allocation3 + $0x20] sm:$0xff] inf
    %49 = vst [vmem:[#allocation3 + $0x28] sm:$0xff] inf
    %50 = vst [vmem:[#allocation3 + $0x30] sm:$0xff] inf
    %51 = vst [vmem:[#allocation3 + $0x38] sm:$0xff] inf
    %52 = vst [vmem:[#allocation3 + $0x40] sm:$0xff] inf
    %53 = vst [vmem:[#allocation3 + $0x48] sm:$0xff] inf
    %54 = vst [vmem:[#allocation3 + $0x50] sm:$0xff] inf
    %55 = vst [vmem:[#allocation3 + $0x58] sm:$0xff] inf
    %56 = vst [vmem:[#allocation3 + $0x60] sm:$0xff] inf
    %57 = vst [vmem:[#allocation3 + $0x68] sm:$0xff] inf
    %58 = vst [vmem:[#allocation3 + $0x70] sm:$0xff] inf
    %59 = vst [vmem:[#allocation3 + $0x78] sm:$0xff] inf
  $region29: #{tpu_custom_call.1} parent=0 // pred_fallthru
    _
  %v60 = vld [vmem:[%s4] sm:$0xf]
  %v61 = vld [vmem:[%s4 + $0x4] sm:$0xf]
  %v62 = vld [vmem:[%s4 + $0x8] sm:$0xf]
  %v63 = vld [vmem:[%s4 + $0xc] sm:$0xf]
  %v64 = vld [vmem:[%s4 + $0x10] sm:$0xf]
  %v65 = vld [vmem:[%s4 + $0x14] sm:$0xf]
  %v66 = vld [vmem:[%s4 + $0x18] sm:$0xf]
  %v67 = vld [vmem:[%s4 + $0x1c] sm:$0xf]
  %v68 = vld [vmem:[%s4 + $0x20] sm:$0xf]
  %v69 = vld [vmem:[%s4 + $0x24] sm:$0xf]
  %v70 = vld [vmem:[%s4 + $0x28] sm:$0xf]
  %v71 = vld [vmem:[%s4 + $0x2c] sm:$0xf]
  %v72 = vld [vmem:[%s4 + $0x30] sm:$0xf]
  %v73 = vld [vmem:[%s4 + $0x34] sm:$0xf]
  %v74 = vld [vmem:[%s4 + $0x38] sm:$0xf]
  %v75 = vld [vmem:[%s4 + $0x3c] sm:$0xf]
  %v76 = vld [vmem:[%s5] sm:$0xf]
  %v77 = vld [vmem:[%s5 + $0x4] sm:$0xf]
  %v78 = vld [vmem:[%s5 + $0x8] sm:$0xf]
  %v79 = vld [vmem:[%s5 + $0xc] sm:$0xf]
  %v96 = vunpack.c.l.b16 %v60
  %v97 = vunpack.c.l.b16 %v61
  %v98 = vunpack.c.l.b16 %v62
  %v99 = vunpack.c.l.b16 %v63
  %v100 = vunpack.c.l.b16 %v64
  %v101 = vunpack.c.l.b16 %v65
  %v102 = vunpack.c.l.b16 %v66
  %v103 = vunpack.c.l.b16 %v67
  %v104 = vunpack.c.l.b16 %v68
  %v105 = vunpack.c.l.b16 %v69
  %v106 = vunpack.c.l.b16 %v70
  %v107 = vunpack.c.l.b16 %v71
  %v108 = vunpack.c.l.b16 %v72
  %v109 = vunpack.c.l.b16 %v73
  %v110 = vunpack.c.l.b16 %v74
  %v111 = vunpack.c.l.b16 %v75
  %v112 = vpack.c.b16 %v97, %v96
  %v113 = vpack.c.b16 %v99, %v98
  %v114 = vpack.c.b16 %v101, %v100
  %v115 = vpack.c.b16 %v103, %v102
  %v116 = vpack.c.b16 %v105, %v104
  %v117 = vpack.c.b16 %v107, %v106
  %v118 = vpack.c.b16 %v109, %v108
  %v119 = vpack.c.b16 %v111, %v110
  %v124 = vunpack.c.l.b16 %v76
  %v125 = vunpack.c.l.b16 %v77
  %v126 = vunpack.c.l.b16 %v78
  %v127 = vunpack.c.l.b16 %v79
  %v128 = vpack.c.b16 %v125, %v124
  %v129 = vpack.c.b16 %v127, %v126
  %vm132 = vcmask 261120
  %v134 = vsel %vm132, %v112, 0
  %v137 = vsel %vm132, %v113, 0
  %v140 = vsel %vm132, %v114, 0
  %v143 = vsel %vm132, %v115, 0
  %v146 = vsel %vm132, %v116, 0
  %v149 = vsel %vm132, %v117, 0
  %v152 = vsel %vm132, %v118, 0
  %v155 = vsel %vm132, %v119, 0
  %157 = vmatprep.subr.bf16.mxu0 0
  %158 = vmatpush1.bf16.msra.mxu0 %v128
  %159 = vmatprep.subr.bf16.mxu0 0
  %160 = vmatpush1.bf16.msra.mxu0 %v129
  %161 = vmatprep.subr.bf16.mxu0 0
  %162 = vmatpush1.bf16.msra.mxu0 0
  %163 = vmatprep.subr.bf16.mxu0 0
  %164 = vmatpush1.bf16.msra.mxu0 0
  %165 = vmatprep.subr.bf16.mxu0 0
  %166 = vmatpush1.bf16.msra.mxu0 0
  %167 = vmatprep.subr.bf16.mxu0 0
  %168 = vmatpush1.bf16.msra.mxu0 0
  %169 = vmatprep.subr.bf16.mxu0 0
  %170 = vmatpush1.bf16.msra.mxu0 0
  %171 = vmatprep.subr.bf16.mxu0 0
  %172 = vmatpush1.bf16.msra.mxu0 0
  %173 = vmatprep.subr.bf16.mxu0 0
  %174 = vmatpush1.bf16.msra.mxu0 0
  %175 = vmatprep.subr.bf16.mxu0 0
  %176 = vmatpush1.bf16.msra.mxu0 0
  %177 = vmatprep.subr.bf16.mxu0 0
  %178 = vmatpush1.bf16.msra.mxu0 0
  %179 = vmatprep.subr.bf16.mxu0 0
  %180 = vmatpush1.bf16.msra.mxu0 0
  %181 = vmatprep.subr.bf16.mxu0 0
  %182 = vmatpush1.bf16.msra.mxu0 0
  %183 = vmatprep.subr.bf16.mxu0 0
  %184 = vmatpush1.bf16.msra.mxu0 0
  %185 = vmatprep.subr.bf16.mxu0 0
  %186 = vmatpush1.bf16.msra.mxu0 0
  %187 = vmatprep.subr.bf16.mxu0 0
  %188 = vmatpush1.bf16.msra.mxu0 0
  %189 = vmatprep.mubr.bf16.mxu0 0
  %190 = vmatmul.mubr.bf16.gmra.mrb[0].mxu0 %v134
  %v191 = vpop.f32.mrb[0].mxu0
  %v192 = vadd.f32 0.0, %v191
  %v193 = vpop.f32.mrb[0].mxu0
  %v194 = vpop.f32.mrb[0].mxu0
  %v195 = vadd.f32 0.0, %v194
  %v196 = vpop.f32.mrb[0].mxu0
  %197 = vmatprep.mubr.bf16.mxu0 0
  %198 = vmatmul.mubr.bf16.gmra.mrb[0].mxu0 %v137
  %v199 = vpop.f32.mrb[0].mxu0
  %v200 = vadd.f32 0.0, %v199
  %v201 = vpop.f32.mrb[0].mxu0
  %v202 = vpop.f32.mrb[0].mxu0
  %v203 = vadd.f32 0.0, %v202
  %v204 = vpop.f32.mrb[0].mxu0
  %205 = vmatprep.mubr.bf16.mxu0 0
  %206 = vmatmul.mubr.bf16.gmra.mrb[0].mxu0 %v140
  %v207 = vpop.f32.mrb[0].mxu0
  %v208 = vadd.f32 0.0, %v207
  %v209 = vpop.f32.mrb[0].mxu0
  %v210 = vpop.f32.mrb[0].mxu0
  %v211 = vadd.f32 0.0, %v210
  %v212 = vpop.f32.mrb[0].mxu0
  %213 = vmatprep.mubr.bf16.mxu0 0
  %214 = vmatmul.mubr.bf16.gmra.mrb[0].mxu0 %v143
  %v215 = vpop.f32.mrb[0].mxu0
  %v216 = vadd.f32 0.0, %v215
  %v217 = vpop.f32.mrb[0].mxu0
  %v218 = vpop.f32.mrb[0].mxu0
  %v219 = vadd.f32 0.0, %v218
  %v220 = vpop.f32.mrb[0].mxu0
  %221 = vmatprep.mubr.bf16.mxu0 0
  %222 = vmatmul.mubr.bf16.gmra.mrb[0].mxu0 %v146
  %v223 = vpop.f32.mrb[0].mxu0
  %v224 = vadd.f32 0.0, %v223
  %v225 = vpop.f32.mrb[0].mxu0
  %v226 = vpop.f32.mrb[0].mxu0
  %v227 = vadd.f32 0.0, %v226
  %v228 = vpop.f32.mrb[0].mxu0
  %229 = vmatprep.mubr.bf16.mxu0 0
  %230 = vmatmul.mubr.bf16.gmra.mrb[0].mxu0 %v149
  %v231 = vpop.f32.mrb[0].mxu0
  %v232 = vadd.f32 0.0, %v231
  %v233 = vpop.f32.mrb[0].mxu0
  %v234 = vpop.f32.mrb[0].mxu0
  %v235 = vadd.f32 0.0, %v234
  %v236 = vpop.f32.mrb[0].mxu0
  %237 = vmatprep.mubr.bf16.mxu0 0
  %238 = vmatmul.mubr.bf16.gmra.mrb[0].mxu0 %v152
  %v239 = vpop.f32.mrb[0].mxu0
  %v240 = vadd.f32 0.0, %v239
  %v241 = vpop.f32.mrb[0].mxu0
  %v242 = vpop.f32.mrb[0].mxu0
  %v243 = vadd.f32 0.0, %v242
  %v244 = vpop.f32.mrb[0].mxu0
  %245 = vmatprep.mubr.bf16.mxu0 0
  %246 = vmatmul.mubr.bf16.gmra.mrb[0].mxu0 %v155
  %v247 = vpop.f32.mrb[0].mxu0
  %v248 = vadd.f32 0.0, %v247
  %v249 = vpop.f32.mrb[0].mxu0
  %v250 = vpop.f32.mrb[0].mxu0
  %v251 = vadd.f32 0.0, %v250
  %v252 = vpop.f32.mrb[0].mxu0
  %253 = vdwg.mxu0
  %v254 = vld [vmem:[%s3] sm:$0x1]
  %v256 = vlaneseq
  %v257 = vshrl.u32 %v256, 7
  %v258 = vsub.s32 0, %v257
  %v259 = vrot.slane %v254, %v258
  %v261 = vsub.f32 %v259, %v192
  %v262 = vsub.f32 %v259, %v195
  %v263 = vsub.f32 %v259, %v200
  %v264 = vsub.f32 %v259, %v203
  %v265 = vsub.f32 %v259, %v208
  %v266 = vsub.f32 %v259, %v211
  %v267 = vsub.f32 %v259, %v216
  %v268 = vsub.f32 %v259, %v219
  %v269 = vsub.f32 %v259, %v224
  %v270 = vsub.f32 %v259, %v227
  %v271 = vsub.f32 %v259, %v232
  %v272 = vsub.f32 %v259, %v235
  %v273 = vsub.f32 %v259, %v240
  %v274 = vsub.f32 %v259, %v243
  %v275 = vsub.f32 %v259, %v248
  %v276 = vsub.f32 %v259, %v251
  %v277 = vld [vmem:[%s0] sm:$0xff]
  %v278 = vld [vmem:[%s0 + $0x8] sm:$0xff]
  %v279 = vld [vmem:[%s0 + $0x10] sm:$0xff]
  %v280 = vld [vmem:[%s0 + $0x18] sm:$0xff]
  %v281 = vld [vmem:[%s0 + $0x20] sm:$0xff]
  %v282 = vld [vmem:[%s0 + $0x28] sm:$0xff]
  %v283 = vld [vmem:[%s0 + $0x30] sm:$0xff]
  %v284 = vld [vmem:[%s0 + $0x38] sm:$0xff]
  %v285 = vld [vmem:[%s0 + $0x40] sm:$0xff]
  %v286 = vld [vmem:[%s0 + $0x48] sm:$0xff]
  %v287 = vld [vmem:[%s0 + $0x50] sm:$0xff]
  %v288 = vld [vmem:[%s0 + $0x58] sm:$0xff]
  %v289 = vld [vmem:[%s0 + $0x60] sm:$0xff]
  %v290 = vld [vmem:[%s0 + $0x68] sm:$0xff]
  %v291 = vld [vmem:[%s0 + $0x70] sm:$0xff]
  %v292 = vld [vmem:[%s0 + $0x78] sm:$0xff]
  %v293 = vld [vmem:[%s1] sm:$0x1]
  %294 = vset.pattern.permute.xlu0 0
  %295 = vperm.xlu0 %294, %v277
  %v296 = vpop.permute.xlu0 %295
  %297 = vset.pattern.permute.xlu0 0
  %298 = vperm.xlu0 %297, %v278
  %v299 = vpop.permute.xlu0 %298
  %300 = vset.pattern.permute.xlu0 0
  %301 = vperm.xlu0 %300, %v279
  %v302 = vpop.permute.xlu0 %301
  %303 = vset.pattern.permute.xlu0 0
  %304 = vperm.xlu0 %303, %v280
  %v305 = vpop.permute.xlu0 %304
  %306 = vset.pattern.permute.xlu0 0
  %307 = vperm.xlu0 %306, %v281
  %v308 = vpop.permute.xlu0 %307
  %309 = vset.pattern.permute.xlu0 0
  %310 = vperm.xlu0 %309, %v282
  %v311 = vpop.permute.xlu0 %310
  %312 = vset.pattern.permute.xlu0 0
  %313 = vperm.xlu0 %312, %v283
  %v314 = vpop.permute.xlu0 %313
  %315 = vset.pattern.permute.xlu0 0
  %316 = vperm.xlu0 %315, %v284
  %v317 = vpop.permute.xlu0 %316
  %318 = vset.pattern.permute.xlu0 0
  %319 = vperm.xlu0 %318, %v285
  %v320 = vpop.permute.xlu0 %319
  %321 = vset.pattern.permute.xlu0 0
  %322 = vperm.xlu0 %321, %v286
  %v323 = vpop.permute.xlu0 %322
  %324 = vset.pattern.permute.xlu0 0
  %325 = vperm.xlu0 %324, %v287
  %v326 = vpop.permute.xlu0 %325
  %327 = vset.pattern.permute.xlu0 0
  %328 = vperm.xlu0 %327, %v288
  %v329 = vpop.permute.xlu0 %328
  %330 = vset.pattern.permute.xlu0 0
  %331 = vperm.xlu0 %330, %v289
  %v332 = vpop.permute.xlu0 %331
  %333 = vset.pattern.permute.xlu0 0
  %334 = vperm.xlu0 %333, %v290
  %v335 = vpop.permute.xlu0 %334
  %336 = vset.pattern.permute.xlu0 0
  %337 = vperm.xlu0 %336, %v291
  %v338 = vpop.permute.xlu0 %337
  %339 = vset.pattern.permute.xlu0 0
  %340 = vperm.xlu0 %339, %v292
  %v341 = vpop.permute.xlu0 %340
  %v342 = vlaneseq
  %v343 = vshrl.u32 %v342, 7
  %v344 = vsub.s32 0, %v343
  %v345 = vrot.slane %v293, %v344
  %vm346 = vcmp.eq.s32.totalorder %v296, %v345
  %vm347 = vcmp.eq.s32.totalorder %v299, %v345
  %vm348 = vcmp.eq.s32.totalorder %v302, %v345
  %vm349 = vcmp.eq.s32.totalorder %v305, %v345
  %vm350 = vcmp.eq.s32.totalorder %v308, %v345
  %vm351 = vcmp.eq.s32.totalorder %v311, %v345
  %vm352 = vcmp.eq.s32.totalorder %v314, %v345
  %vm353 = vcmp.eq.s32.totalorder %v317, %v345
  %vm354 = vcmp.eq.s32.totalorder %v320, %v345
  %vm355 = vcmp.eq.s32.totalorder %v323, %v345
  %vm356 = vcmp.eq.s32.totalorder %v326, %v345
  %vm357 = vcmp.eq.s32.totalorder %v329, %v345
  %vm358 = vcmp.eq.s32.totalorder %v332, %v345
  %vm359 = vcmp.eq.s32.totalorder %v335, %v345
  %vm360 = vcmp.eq.s32.totalorder %v338, %v345
  %vm361 = vcmp.eq.s32.totalorder %v341, %v345
  %v362 = vsel %vm346, %v261, -inf
  %v363 = vsel %vm347, %v262, -inf
  %v364 = vsel %vm348, %v263, -inf
  %v365 = vsel %vm349, %v264, -inf
  %v366 = vsel %vm350, %v265, -inf
  %v367 = vsel %vm351, %v266, -inf
  %v368 = vsel %vm352, %v267, -inf
  %v369 = vsel %vm353, %v268, -inf
  %v370 = vsel %vm354, %v269, -inf
  %v371 = vsel %vm355, %v270, -inf
  %v372 = vsel %vm356, %v271, -inf
  %v373 = vsel %vm357, %v272, -inf
  %v374 = vsel %vm358, %v273, -inf
  %v375 = vsel %vm359, %v274, -inf
  %v376 = vsel %vm360, %v275, -inf
  %v377 = vsel %vm361, %v276, -inf
  %v378 = vsel %vm346, inf, %v261
  %v379 = vsel %vm347, inf, %v262
  %v380 = vsel %vm348, inf, %v263
  %v381 = vsel %vm349, inf, %v264
  %v382 = vsel %vm350, inf, %v265
  %v383 = vsel %vm351, inf, %v266
  %v384 = vsel %vm352, inf, %v267
  %v385 = vsel %vm353, inf, %v268
  %v386 = vsel %vm354, inf, %v269
  %v387 = vsel %vm355, inf, %v270
  %v388 = vsel %vm356, inf, %v271
  %v389 = vsel %vm357, inf, %v272
  %v390 = vsel %vm358, inf, %v273
  %v391 = vsel %vm359, inf, %v274
  %v392 = vsel %vm360, inf, %v275
  %v393 = vsel %vm361, inf, %v276
  %v394 = vld [vmem:[#allocation2] sm:$0xff]
  %v395 = vld [vmem:[#allocation2 + $0x8] sm:$0xff]
  %v396 = vld [vmem:[#allocation2 + $0x10] sm:$0xff]
  %v397 = vld [vmem:[#allocation2 + $0x18] sm:$0xff]
  %v398 = vld [vmem:[#allocation2 + $0x20] sm:$0xff]
  %v399 = vld [vmem:[#allocation2 + $0x28] sm:$0xff]
  %v400 = vld [vmem:[#allocation2 + $0x30] sm:$0xff]
  %v401 = vld [vmem:[#allocation2 + $0x38] sm:$0xff]
  %v402 = vld [vmem:[#allocation2 + $0x40] sm:$0xff]
  %v403 = vld [vmem:[#allocation2 + $0x48] sm:$0xff]
  %v404 = vld [vmem:[#allocation2 + $0x50] sm:$0xff]
  %v405 = vld [vmem:[#allocation2 + $0x58] sm:$0xff]
  %v406 = vld [vmem:[#allocation2 + $0x60] sm:$0xff]
  %v407 = vld [vmem:[#allocation2 + $0x68] sm:$0xff]
  %v408 = vld [vmem:[#allocation2 + $0x70] sm:$0xff]
  %v409 = vld [vmem:[#allocation2 + $0x78] sm:$0xff]
  %v410 = vmax.f32 %v394, %v362
  %v411 = vmax.f32 %v395, %v363
  %v412 = vmax.f32 %v396, %v364
  %v413 = vmax.f32 %v397, %v365
  %v414 = vmax.f32 %v398, %v366
  %v415 = vmax.f32 %v399, %v367
  %v416 = vmax.f32 %v400, %v368
  %v417 = vmax.f32 %v401, %v369
  %v418 = vmax.f32 %v402, %v370
  %v419 = vmax.f32 %v403, %v371
  %v420 = vmax.f32 %v404, %v372
  %v421 = vmax.f32 %v405, %v373
  %v422 = vmax.f32 %v406, %v374
  %v423 = vmax.f32 %v407, %v375
  %v424 = vmax.f32 %v408, %v376
  %v425 = vmax.f32 %v409, %v377
  %426 = vst [vmem:[#allocation2] sm:$0xff] %v410
  %427 = vst [vmem:[#allocation2 + $0x8] sm:$0xff] %v411
  %428 = vst [vmem:[#allocation2 + $0x10] sm:$0xff] %v412
  %429 = vst [vmem:[#allocation2 + $0x18] sm:$0xff] %v413
  %430 = vst [vmem:[#allocation2 + $0x20] sm:$0xff] %v414
  %431 = vst [vmem:[#allocation2 + $0x28] sm:$0xff] %v415
  %432 = vst [vmem:[#allocation2 + $0x30] sm:$0xff] %v416
  %433 = vst [vmem:[#allocation2 + $0x38] sm:$0xff] %v417
  %434 = vst [vmem:[#allocation2 + $0x40] sm:$0xff] %v418
  %435 = vst [vmem:[#allocation2 + $0x48] sm:$0xff] %v419
  %436 = vst [vmem:[#allocation2 + $0x50] sm:$0xff] %v420
  %437 = vst [vmem:[#allocation2 + $0x58] sm:$0xff] %v421
  %438 = vst [vmem:[#allocation2 + $0x60] sm:$0xff] %v422
  %439 = vst [vmem:[#allocation2 + $0x68] sm:$0xff] %v423
  %440 = vst [vmem:[#allocation2 + $0x70] sm:$0xff] %v424
  %441 = vst [vmem:[#allocation2 + $0x78] sm:$0xff] %v425
  %v442 = vld [vmem:[#allocation3] sm:$0xff]
  %v443 = vld [vmem:[#allocation3 + $0x8] sm:$0xff]
  %v444 = vld [vmem:[#allocation3 + $0x10] sm:$0xff]
  %v445 = vld [vmem:[#allocation3 + $0x18] sm:$0xff]
  %v446 = vld [vmem:[#allocation3 + $0x20] sm:$0xff]
  %v447 = vld [vmem:[#allocation3 + $0x28] sm:$0xff]
  %v448 = vld [vmem:[#allocation3 + $0x30] sm:$0xff]
  %v449 = vld [vmem:[#allocation3 + $0x38] sm:$0xff]
  %v450 = vld [vmem:[#allocation3 + $0x40] sm:$0xff]
  %v451 = vld [vmem:[#allocation3 + $0x48] sm:$0xff]
  %v452 = vld [vmem:[#allocation3 + $0x50] sm:$0xff]
  %v453 = vld [vmem:[#allocation3 + $0x58] sm:$0xff]
  %v454 = vld [vmem:[#allocation3 + $0x60] sm:$0xff]
  %v455 = vld [vmem:[#allocation3 + $0x68] sm:$0xff]
  %v456 = vld [vmem:[#allocation3 + $0x70] sm:$0xff]
  %v457 = vld [vmem:[#allocation3 + $0x78] sm:$0xff]
  %v458 = vmin.f32 %v442, %v378
  %v459 = vmin.f32 %v443, %v379
  %v460 = vmin.f32 %v444, %v380
  %v461 = vmin.f32 %v445, %v381
  %v462 = vmin.f32 %v446, %v382
  %v463 = vmin.f32 %v447, %v383
  %v464 = vmin.f32 %v448, %v384
  %v465 = vmin.f32 %v449, %v385
  %v466 = vmin.f32 %v450, %v386
  %v467 = vmin.f32 %v451, %v387
  %v468 = vmin.f32 %v452, %v388
  %v469 = vmin.f32 %v453, %v389
  %v470 = vmin.f32 %v454, %v390
  %v471 = vmin.f32 %v455, %v391
  %v472 = vmin.f32 %v456, %v392
  %v473 = vmin.f32 %v457, %v393
  %474 = vst [vmem:[#allocation3] sm:$0xff] %v458
  %475 = vst [vmem:[#allocation3 + $0x8] sm:$0xff] %v459
  %476 = vst [vmem:[#allocation3 + $0x10] sm:$0xff] %v460
  %477 = vst [vmem:[#allocation3 + $0x18] sm:$0xff] %v461
  %478 = vst [vmem:[#allocation3 + $0x20] sm:$0xff] %v462
  %479 = vst [vmem:[#allocation3 + $0x28] sm:$0xff] %v463
  %480 = vst [vmem:[#allocation3 + $0x30] sm:$0xff] %v464
  %481 = vst [vmem:[#allocation3 + $0x38] sm:$0xff] %v465
  %482 = vst [vmem:[#allocation3 + $0x40] sm:$0xff] %v466
  %483 = vst [vmem:[#allocation3 + $0x48] sm:$0xff] %v467
  %484 = vst [vmem:[#allocation3 + $0x50] sm:$0xff] %v468
  %485 = vst [vmem:[#allocation3 + $0x58] sm:$0xff] %v469
  %486 = vst [vmem:[#allocation3 + $0x60] sm:$0xff] %v470
  %487 = vst [vmem:[#allocation3 + $0x68] sm:$0xff] %v471
  %488 = vst [vmem:[#allocation3 + $0x70] sm:$0xff] %v472
  %489 = vst [vmem:[#allocation3 + $0x78] sm:$0xff] %v473
  // Predicated region
  $region30: #{tpu_custom_call.1} parent=0 // pred_check
    %p490 = pneg %p24
  $region31: #{tpu_custom_call.1} parent=0 // pred_check_branch
    %492 = sbr.rel (%p490) target = $region33
  $region32: #{tpu_custom_call.1} parent=0 // pred_region
    %v493 = vld [vmem:[%s2] sm:$0xff]
    %v494 = vld [vmem:[%s2 + $0x8] sm:$0xff]
    %v495 = vld [vmem:[%s2 + $0x10] sm:$0xff]
    %v496 = vld [vmem:[%s2 + $0x18] sm:$0xff]
    %v497 = vld [vmem:[%s2 + $0x20] sm:$0xff]
    %v498 = vld [vmem:[%s2 + $0x28] sm:$0xff]
    %v499 = vld [vmem:[%s2 + $0x30] sm:$0xff]
    %v500 = vld [vmem:[%s2 + $0x38] sm:$0xff]
    %v501 = vld [vmem:[%s2 + $0x40] sm:$0xff]
    %v502 = vld [vmem:[%s2 + $0x48] sm:$0xff]
    %v503 = vld [vmem:[%s2 + $0x50] sm:$0xff]
    %v504 = vld [vmem:[%s2 + $0x58] sm:$0xff]
    %v505 = vld [vmem:[%s2 + $0x60] sm:$0xff]
    %v506 = vld [vmem:[%s2 + $0x68] sm:$0xff]
    %v507 = vld [vmem:[%s2 + $0x70] sm:$0xff]
    %v508 = vld [vmem:[%s2 + $0x78] sm:$0xff]
    %v509 = vld [vmem:[#allocation2] sm:$0xff]
    %v510 = vld [vmem:[#allocation2 + $0x8] sm:$0xff]
    %v511 = vld [vmem:[#allocation2 + $0x10] sm:$0xff]
    %v512 = vld [vmem:[#allocation2 + $0x18] sm:$0xff]
    %v513 = vld [vmem:[#allocation2 + $0x20] sm:$0xff]
    %v514 = vld [vmem:[#allocation2 + $0x28] sm:$0xff]
    %v515 = vld [vmem:[#allocation2 + $0x30] sm:$0xff]
    %v516 = vld [vmem:[#allocation2 + $0x38] sm:$0xff]
    %v517 = vld [vmem:[#allocation2 + $0x40] sm:$0xff]
    %v518 = vld [vmem:[#allocation2 + $0x48] sm:$0xff]
    %v519 = vld [vmem:[#allocation2 + $0x50] sm:$0xff]
    %v520 = vld [vmem:[#allocation2 + $0x58] sm:$0xff]
    %v521 = vld [vmem:[#allocation2 + $0x60] sm:$0xff]
    %v522 = vld [vmem:[#allocation2 + $0x68] sm:$0xff]
    %v523 = vld [vmem:[#allocation2 + $0x70] sm:$0xff]
    %v524 = vld [vmem:[#allocation2 + $0x78] sm:$0xff]
    %525 = vmax.xlane.f32.xlu0 %v509
    %v526 = vpop.xlane.xlu0 %525
    %527 = vmax.xlane.f32.xlu0 %v510
    %v528 = vpop.xlane.xlu0 %527
    %529 = vmax.xlane.f32.xlu0 %v511
    %v530 = vpop.xlane.xlu0 %529
    %531 = vmax.xlane.f32.xlu0 %v512
    %v532 = vpop.xlane.xlu0 %531
    %533 = vmax.xlane.f32.xlu0 %v513
    %v534 = vpop.xlane.xlu0 %533
    %535 = vmax.xlane.f32.xlu0 %v514
    %v536 = vpop.xlane.xlu0 %535
    %537 = vmax.xlane.f32.xlu0 %v515
    %v538 = vpop.xlane.xlu0 %537
    %539 = vmax.xlane.f32.xlu0 %v516
    %v540 = vpop.xlane.xlu0 %539
    %541 = vmax.xlane.f32.xlu0 %v517
    %v542 = vpop.xlane.xlu0 %541
    %543 = vmax.xlane.f32.xlu0 %v518
    %v544 = vpop.xlane.xlu0 %543
    %545 = vmax.xlane.f32.xlu0 %v519
    %v546 = vpop.xlane.xlu0 %545
    %547 = vmax.xlane.f32.xlu0 %v520
    %v548 = vpop.xlane.xlu0 %547
    %549 = vmax.xlane.f32.xlu0 %v521
    %v550 = vpop.xlane.xlu0 %549
    %551 = vmax.xlane.f32.xlu0 %v522
    %v552 = vpop.xlane.xlu0 %551
    %553 = vmax.xlane.f32.xlu0 %v523
    %v554 = vpop.xlane.xlu0 %553
    %555 = vmax.xlane.f32.xlu0 %v524
    %v556 = vpop.xlane.xlu0 %555
    %v557 = vadd.f32 %v526, %v493
    %v558 = vadd.f32 %v528, %v494
    %v559 = vadd.f32 %v530, %v495
    %v560 = vadd.f32 %v532, %v496
    %v561 = vadd.f32 %v534, %v497
    %v562 = vadd.f32 %v536, %v498
    %v563 = vadd.f32 %v538, %v499
    %v564 = vadd.f32 %v540, %v500
    %v565 = vadd.f32 %v542, %v501
    %v566 = vadd.f32 %v544, %v502
    %v567 = vadd.f32 %v546, %v503
    %v568 = vadd.f32 %v548, %v504
    %v569 = vadd.f32 %v550, %v505
    %v570 = vadd.f32 %v552, %v506
    %v571 = vadd.f32 %v554, %v507
    %v572 = vadd.f32 %v556, %v508
    %v573 = vmul.f32 %v557, 2.0
    %v574 = vmul.f32 %v558, 2.0
    %v575 = vmul.f32 %v559, 2.0
    %v576 = vmul.f32 %v560, 2.0
    %v577 = vmul.f32 %v561, 2.0
    %v578 = vmul.f32 %v562, 2.0
    %v579 = vmul.f32 %v563, 2.0
    %v580 = vmul.f32 %v564, 2.0
    %v581 = vmul.f32 %v565, 2.0
    %v582 = vmul.f32 %v566, 2.0
    %v583 = vmul.f32 %v567, 2.0
    %v584 = vmul.f32 %v568, 2.0
    %v585 = vmul.f32 %v569, 2.0
    %v586 = vmul.f32 %v570, 2.0
    %v587 = vmul.f32 %v571, 2.0
    %v588 = vmul.f32 %v572, 2.0
    %v589 = vld [vmem:[#allocation3] sm:$0xff]
    %v590 = vld [vmem:[#allocation3 + $0x8] sm:$0xff]
    %v591 = vld [vmem:[#allocation3 + $0x10] sm:$0xff]
    %v592 = vld [vmem:[#allocation3 + $0x18] sm:$0xff]
    %v593 = vld [vmem:[#allocation3 + $0x20] sm:$0xff]
    %v594 = vld [vmem:[#allocation3 + $0x28] sm:$0xff]
    %v595 = vld [vmem:[#allocation3 + $0x30] sm:$0xff]
    %v596 = vld [vmem:[#allocation3 + $0x38] sm:$0xff]
    %v597 = vld [vmem:[#allocation3 + $0x40] sm:$0xff]
    %v598 = vld [vmem:[#allocation3 + $0x48] sm:$0xff]
    %v599 = vld [vmem:[#allocation3 + $0x50] sm:$0xff]
    %v600 = vld [vmem:[#allocation3 + $0x58] sm:$0xff]
    %v601 = vld [vmem:[#allocation3 + $0x60] sm:$0xff]
    %v602 = vld [vmem:[#allocation3 + $0x68] sm:$0xff]
    %v603 = vld [vmem:[#allocation3 + $0x70] sm:$0xff]
    %v604 = vld [vmem:[#allocation3 + $0x78] sm:$0xff]
    %605 = vmin.xlane.f32.xlu0 %v589
    %v606 = vpop.xlane.xlu0 %605
    %607 = vmin.xlane.f32.xlu0 %v590
    %v608 = vpop.xlane.xlu0 %607
    %609 = vmin.xlane.f32.xlu0 %v591
    %v610 = vpop.xlane.xlu0 %609
    %611 = vmin.xlane.f32.xlu0 %v592
    %v612 = vpop.xlane.xlu0 %611
    %613 = vmin.xlane.f32.xlu0 %v593
    %v614 = vpop.xlane.xlu0 %613
    %615 = vmin.xlane.f32.xlu0 %v594
    %v616 = vpop.xlane.xlu0 %615
    %617 = vmin.xlane.f32.xlu0 %v595
    %v618 = vpop.xlane.xlu0 %617
    %619 = vmin.xlane.f32.xlu0 %v596
    %v620 = vpop.xlane.xlu0 %619
    %621 = vmin.xlane.f32.xlu0 %v597
    %v622 = vpop.xlane.xlu0 %621
    %623 = vmin.xlane.f32.xlu0 %v598
    %v624 = vpop.xlane.xlu0 %623
    %625 = vmin.xlane.f32.xlu0 %v599
    %v626 = vpop.xlane.xlu0 %625
    %627 = vmin.xlane.f32.xlu0 %v600
    %v628 = vpop.xlane.xlu0 %627
    %629 = vmin.xlane.f32.xlu0 %v601
    %v630 = vpop.xlane.xlu0 %629
    %631 = vmin.xlane.f32.xlu0 %v602
    %v632 = vpop.xlane.xlu0 %631
    %633 = vmin.xlane.f32.xlu0 %v603
    %v634 = vpop.xlane.xlu0 %633
    %635 = vmin.xlane.f32.xlu0 %v604
    %v636 = vpop.xlane.xlu0 %635
    %v637 = vadd.f32 %v606, %v493
    %v638 = vadd.f32 %v608, %v494
    %v639 = vadd.f32 %v610, %v495
    %v640 = vadd.f32 %v612, %v496
    %v641 = vadd.f32 %v614, %v497
    %v642 = vadd.f32 %v616, %v498
    %v643 = vadd.f32 %v618, %v499
    %v644 = vadd.f32 %v620, %v500
    %v645 = vadd.f32 %v622, %v501
    %v646 = vadd.f32 %v624, %v502
    %v647 = vadd.f32 %v626, %v503
    %v648 = vadd.f32 %v628, %v504
    %v649 = vadd.f32 %v630, %v505
    %v650 = vadd.f32 %v632, %v506
    %v651 = vadd.f32 %v634, %v507
    %v652 = vadd.f32 %v636, %v508
    %v653 = vmul.f32 %v637, 2.0
    %v654 = vmul.f32 %v638, 2.0
    %v655 = vmul.f32 %v639, 2.0
    %v656 = vmul.f32 %v640, 2.0
    %v657 = vmul.f32 %v641, 2.0
    %v658 = vmul.f32 %v642, 2.0
    %v659 = vmul.f32 %v643, 2.0
    %v660 = vmul.f32 %v644, 2.0
    %v661 = vmul.f32 %v645, 2.0
    %v662 = vmul.f32 %v646, 2.0
    %v663 = vmul.f32 %v647, 2.0
    %v664 = vmul.f32 %v648, 2.0
    %v665 = vmul.f32 %v649, 2.0
    %v666 = vmul.f32 %v650, 2.0
    %v667 = vmul.f32 %v651, 2.0
    %v668 = vmul.f32 %v652, 2.0
    %v669 = vmax.f32 %v573, 1e-12
    %v670 = vmax.f32 %v574, 1e-12
    %v671 = vmax.f32 %v575, 1e-12
    %v672 = vmax.f32 %v576, 1e-12
    %v673 = vmax.f32 %v577, 1e-12
    %v674 = vmax.f32 %v578, 1e-12
    %v675 = vmax.f32 %v579, 1e-12
    %v676 = vmax.f32 %v580, 1e-12
    %v677 = vmax.f32 %v581, 1e-12
    %v678 = vmax.f32 %v582, 1e-12
    %v679 = vmax.f32 %v583, 1e-12
    %v680 = vmax.f32 %v584, 1e-12
    %v681 = vmax.f32 %v585, 1e-12
    %v682 = vmax.f32 %v586, 1e-12
    %v683 = vmax.f32 %v587, 1e-12
    %v684 = vmax.f32 %v588, 1e-12
    %v685 = vrsqrt.pop %v669
    %v686 = vmul.f32 %v669, %v685
    %vm687 = vcmp.eq.f32.partialorder %v669, inf
    %v688 = vsel %vm687, %v669, %v686
    %vm689 = vcmp.eq.f32.partialorder %v669, 0.0
    %v690 = vand.u32 %v669, 2147483648
    %v691 = vsel %vm689, %v690, %v688
    %v692 = vrsqrt.pop %v670
    %v693 = vmul.f32 %v670, %v692
    %vm694 = vcmp.eq.f32.partialorder %v670, inf
    %v695 = vsel %vm694, %v670, %v693
    %vm696 = vcmp.eq.f32.partialorder %v670, 0.0
    %v697 = vand.u32 %v670, 2147483648
    %v698 = vsel %vm696, %v697, %v695
    %v699 = vrsqrt.pop %v671
    %v700 = vmul.f32 %v671, %v699
    %vm701 = vcmp.eq.f32.partialorder %v671, inf
    %v702 = vsel %vm701, %v671, %v700
    %vm703 = vcmp.eq.f32.partialorder %v671, 0.0
    %v704 = vand.u32 %v671, 2147483648
    %v705 = vsel %vm703, %v704, %v702
    %v706 = vrsqrt.pop %v672
    %v707 = vmul.f32 %v672, %v706
    %vm708 = vcmp.eq.f32.partialorder %v672, inf
    %v709 = vsel %vm708, %v672, %v707
    %vm710 = vcmp.eq.f32.partialorder %v672, 0.0
    %v711 = vand.u32 %v672, 2147483648
    %v712 = vsel %vm710, %v711, %v709
    %v713 = vrsqrt.pop %v673
    %v714 = vmul.f32 %v673, %v713
    %vm715 = vcmp.eq.f32.partialorder %v673, inf
    %v716 = vsel %vm715, %v673, %v714
    %vm717 = vcmp.eq.f32.partialorder %v673, 0.0
    %v718 = vand.u32 %v673, 2147483648
    %v719 = vsel %vm717, %v718, %v716
    %v720 = vrsqrt.pop %v674
    %v721 = vmul.f32 %v674, %v720
    %vm722 = vcmp.eq.f32.partialorder %v674, inf
    %v723 = vsel %vm722, %v674, %v721
    %vm724 = vcmp.eq.f32.partialorder %v674, 0.0
    %v725 = vand.u32 %v674, 2147483648
    %v726 = vsel %vm724, %v725, %v723
    %v727 = vrsqrt.pop %v675
    %v728 = vmul.f32 %v675, %v727
    %vm729 = vcmp.eq.f32.partialorder %v675, inf
    %v730 = vsel %vm729, %v675, %v728
    %vm731 = vcmp.eq.f32.partialorder %v675, 0.0
    %v732 = vand.u32 %v675, 2147483648
    %v733 = vsel %vm731, %v732, %v730
    %v734 = vrsqrt.pop %v676
    %v735 = vmul.f32 %v676, %v734
    %vm736 = vcmp.eq.f32.partialorder %v676, inf
    %v737 = vsel %vm736, %v676, %v735
    %vm738 = vcmp.eq.f32.partialorder %v676, 0.0
    %v739 = vand.u32 %v676, 2147483648
    %v740 = vsel %vm738, %v739, %v737
    %v741 = vrsqrt.pop %v677
    %v742 = vmul.f32 %v677, %v741
    %vm743 = vcmp.eq.f32.partialorder %v677, inf
    %v744 = vsel %vm743, %v677, %v742
    %vm745 = vcmp.eq.f32.partialorder %v677, 0.0
    %v746 = vand.u32 %v677, 2147483648
    %v747 = vsel %vm745, %v746, %v744
    %v748 = vrsqrt.pop %v678
    %v749 = vmul.f32 %v678, %v748
    %vm750 = vcmp.eq.f32.partialorder %v678, inf
    %v751 = vsel %vm750, %v678, %v749
    %vm752 = vcmp.eq.f32.partialorder %v678, 0.0
    %v753 = vand.u32 %v678, 2147483648
    %v754 = vsel %vm752, %v753, %v751
    %v755 = vrsqrt.pop %v679
    %v756 = vmul.f32 %v679, %v755
    %vm757 = vcmp.eq.f32.partialorder %v679, inf
    %v758 = vsel %vm757, %v679, %v756
    %vm759 = vcmp.eq.f32.partialorder %v679, 0.0
    %v760 = vand.u32 %v679, 2147483648
    %v761 = vsel %vm759, %v760, %v758
    %v762 = vrsqrt.pop %v680
    %v763 = vmul.f32 %v680, %v762
    %vm764 = vcmp.eq.f32.partialorder %v680, inf
    %v765 = vsel %vm764, %v680, %v763
    %vm766 = vcmp.eq.f32.partialorder %v680, 0.0
    %v767 = vand.u32 %v680, 2147483648
    %v768 = vsel %vm766, %v767, %v765
    %v769 = vrsqrt.pop %v681
    %v770 = vmul.f32 %v681, %v769
    %vm771 = vcmp.eq.f32.partialorder %v681, inf
    %v772 = vsel %vm771, %v681, %v770
    %vm773 = vcmp.eq.f32.partialorder %v681, 0.0
    %v774 = vand.u32 %v681, 2147483648
    %v775 = vsel %vm773, %v774, %v772
    %v776 = vrsqrt.pop %v682
    %v777 = vmul.f32 %v682, %v776
    %vm778 = vcmp.eq.f32.partialorder %v682, inf
    %v779 = vsel %vm778, %v682, %v777
    %vm780 = vcmp.eq.f32.partialorder %v682, 0.0
    %v781 = vand.u32 %v682, 2147483648
    %v782 = vsel %vm780, %v781, %v779
    %v783 = vrsqrt.pop %v683
    %v784 = vmul.f32 %v683, %v783
    %vm785 = vcmp.eq.f32.partialorder %v683, inf
    %v786 = vsel %vm785, %v683, %v784
    %vm787 = vcmp.eq.f32.partialorder %v683, 0.0
    %v788 = vand.u32 %v683, 2147483648
    %v789 = vsel %vm787, %v788, %v786
    %v790 = vrsqrt.pop %v684
    %v791 = vmul.f32 %v684, %v790
    %vm792 = vcmp.eq.f32.partialorder %v684, inf
    %v793 = vsel %vm792, %v684, %v791
    %vm794 = vcmp.eq.f32.partialorder %v684, 0.0
    %v795 = vand.u32 %v684, 2147483648
    %v796 = vsel %vm794, %v795, %v793
    %v797 = vmax.f32 %v653, 1e-12
    %v798 = vmax.f32 %v654, 1e-12
    %v799 = vmax.f32 %v655, 1e-12
    %v800 = vmax.f32 %v656, 1e-12
    %v801 = vmax.f32 %v657, 1e-12
    %v802 = vmax.f32 %v658, 1e-12
    %v803 = vmax.f32 %v659, 1e-12
    %v804 = vmax.f32 %v660, 1e-12
    %v805 = vmax.f32 %v661, 1e-12
    %v806 = vmax.f32 %v662, 1e-12
    %v807 = vmax.f32 %v663, 1e-12
    %v808 = vmax.f32 %v664, 1e-12
    %v809 = vmax.f32 %v665, 1e-12
    %v810 = vmax.f32 %v666, 1e-12
    %v811 = vmax.f32 %v667, 1e-12
    %v812 = vmax.f32 %v668, 1e-12
    %v813 = vrsqrt.pop %v797
    %v814 = vmul.f32 %v797, %v813
    %vm815 = vcmp.eq.f32.partialorder %v797, inf
    %v816 = vsel %vm815, %v797, %v814
    %vm817 = vcmp.eq.f32.partialorder %v797, 0.0
    %v818 = vand.u32 %v797, 2147483648
    %v819 = vsel %vm817, %v818, %v816
    %v820 = vrsqrt.pop %v798
    %v821 = vmul.f32 %v798, %v820
    %vm822 = vcmp.eq.f32.partialorder %v798, inf
    %v823 = vsel %vm822, %v798, %v821
    %vm824 = vcmp.eq.f32.partialorder %v798, 0.0
    %v825 = vand.u32 %v798, 2147483648
    %v826 = vsel %vm824, %v825, %v823
    %v827 = vrsqrt.pop %v799
    %v828 = vmul.f32 %v799, %v827
    %vm829 = vcmp.eq.f32.partialorder %v799, inf
    %v830 = vsel %vm829, %v799, %v828
    %vm831 = vcmp.eq.f32.partialorder %v799, 0.0
    %v832 = vand.u32 %v799, 2147483648
    %v833 = vsel %vm831, %v832, %v830
    %v834 = vrsqrt.pop %v800
    %v835 = vmul.f32 %v800, %v834
    %vm836 = vcmp.eq.f32.partialorder %v800, inf
    %v837 = vsel %vm836, %v800, %v835
    %vm838 = vcmp.eq.f32.partialorder %v800, 0.0
    %v839 = vand.u32 %v800, 2147483648
    %v840 = vsel %vm838, %v839, %v837
    %v841 = vrsqrt.pop %v801
    %v842 = vmul.f32 %v801, %v841
    %vm843 = vcmp.eq.f32.partialorder %v801, inf
    %v844 = vsel %vm843, %v801, %v842
    %vm845 = vcmp.eq.f32.partialorder %v801, 0.0
    %v846 = vand.u32 %v801, 2147483648
    %v847 = vsel %vm845, %v846, %v844
    %v848 = vrsqrt.pop %v802
    %v849 = vmul.f32 %v802, %v848
    %vm850 = vcmp.eq.f32.partialorder %v802, inf
    %v851 = vsel %vm850, %v802, %v849
    %vm852 = vcmp.eq.f32.partialorder %v802, 0.0
    %v853 = vand.u32 %v802, 2147483648
    %v854 = vsel %vm852, %v853, %v851
    %v855 = vrsqrt.pop %v803
    %v856 = vmul.f32 %v803, %v855
    %vm857 = vcmp.eq.f32.partialorder %v803, inf
    %v858 = vsel %vm857, %v803, %v856
    %vm859 = vcmp.eq.f32.partialorder %v803, 0.0
    %v860 = vand.u32 %v803, 2147483648
    %v861 = vsel %vm859, %v860, %v858
    %v862 = vrsqrt.pop %v804
    %v863 = vmul.f32 %v804, %v862
    %vm864 = vcmp.eq.f32.partialorder %v804, inf
    %v865 = vsel %vm864, %v804, %v863
    %vm866 = vcmp.eq.f32.partialorder %v804, 0.0
    %v867 = vand.u32 %v804, 2147483648
    %v868 = vsel %vm866, %v867, %v865
    %v869 = vrsqrt.pop %v805
    %v870 = vmul.f32 %v805, %v869
    %vm871 = vcmp.eq.f32.partialorder %v805, inf
    %v872 = vsel %vm871, %v805, %v870
    %vm873 = vcmp.eq.f32.partialorder %v805, 0.0
    %v874 = vand.u32 %v805, 2147483648
    %v875 = vsel %vm873, %v874, %v872
    %v876 = vrsqrt.pop %v806
    %v877 = vmul.f32 %v806, %v876
    %vm878 = vcmp.eq.f32.partialorder %v806, inf
    %v879 = vsel %vm878, %v806, %v877
    %vm880 = vcmp.eq.f32.partialorder %v806, 0.0
    %v881 = vand.u32 %v806, 2147483648
    %v882 = vsel %vm880, %v881, %v879
    %v883 = vrsqrt.pop %v807
    %v884 = vmul.f32 %v807, %v883
    %vm885 = vcmp.eq.f32.partialorder %v807, inf
    %v886 = vsel %vm885, %v807, %v884
    %vm887 = vcmp.eq.f32.partialorder %v807, 0.0
    %v888 = vand.u32 %v807, 2147483648
    %v889 = vsel %vm887, %v888, %v886
    %v890 = vrsqrt.pop %v808
    %v891 = vmul.f32 %v808, %v890
    %vm892 = vcmp.eq.f32.partialorder %v808, inf
    %v893 = vsel %vm892, %v808, %v891
    %vm894 = vcmp.eq.f32.partialorder %v808, 0.0
    %v895 = vand.u32 %v808, 2147483648
    %v896 = vsel %vm894, %v895, %v893
    %v897 = vrsqrt.pop %v809
    %v898 = vmul.f32 %v809, %v897
    %vm899 = vcmp.eq.f32.partialorder %v809, inf
    %v900 = vsel %vm899, %v809, %v898
    %vm901 = vcmp.eq.f32.partialorder %v809, 0.0
    %v902 = vand.u32 %v809, 2147483648
    %v903 = vsel %vm901, %v902, %v900
    %v904 = vrsqrt.pop %v810
    %v905 = vmul.f32 %v810, %v904
    %vm906 = vcmp.eq.f32.partialorder %v810, inf
    %v907 = vsel %vm906, %v810, %v905
    %vm908 = vcmp.eq.f32.partialorder %v810, 0.0
    %v909 = vand.u32 %v810, 2147483648
    %v910 = vsel %vm908, %v909, %v907
    %v911 = vrsqrt.pop %v811
    %v912 = vmul.f32 %v811, %v911
    %vm913 = vcmp.eq.f32.partialorder %v811, inf
    %v914 = vsel %vm913, %v811, %v912
    %vm915 = vcmp.eq.f32.partialorder %v811, 0.0
    %v916 = vand.u32 %v811, 2147483648
    %v917 = vsel %vm915, %v916, %v914
    %v918 = vrsqrt.pop %v812
    %v919 = vmul.f32 %v812, %v918
    %vm920 = vcmp.eq.f32.partialorder %v812, inf
    %v921 = vsel %vm920, %v812, %v919
    %vm922 = vcmp.eq.f32.partialorder %v812, 0.0
    %v923 = vand.u32 %v812, 2147483648
    %v924 = vsel %vm922, %v923, %v921
    %v925 = vsub.f32 %v691, %v819
    %v926 = vsub.f32 %v698, %v826
    %v927 = vsub.f32 %v705, %v833
    %v928 = vsub.f32 %v712, %v840
    %v929 = vsub.f32 %v719, %v847
    %v930 = vsub.f32 %v726, %v854
    %v931 = vsub.f32 %v733, %v861
    %v932 = vsub.f32 %v740, %v868
    %v933 = vsub.f32 %v747, %v875
    %v934 = vsub.f32 %v754, %v882
    %v935 = vsub.f32 %v761, %v889
    %v936 = vsub.f32 %v768, %v896
    %v937 = vsub.f32 %v775, %v903
    %v938 = vsub.f32 %v782, %v910
    %v939 = vsub.f32 %v789, %v917
    %v940 = vsub.f32 %v796, %v924
    %v941 = vadd.f32 %v925, 0.3
    %v942 = vadd.f32 %v926, 0.3
    %v943 = vadd.f32 %v927, 0.3
    %v944 = vadd.f32 %v928, 0.3
    %v945 = vadd.f32 %v929, 0.3
    %v946 = vadd.f32 %v930, 0.3
    %v947 = vadd.f32 %v931, 0.3
    %v948 = vadd.f32 %v932, 0.3
    %v949 = vadd.f32 %v933, 0.3
    %v950 = vadd.f32 %v934, 0.3
    %v951 = vadd.f32 %v935, 0.3
    %v952 = vadd.f32 %v936, 0.3
    %v953 = vadd.f32 %v937, 0.3
    %v954 = vadd.f32 %v938, 0.3
    %v955 = vadd.f32 %v939, 0.3
    %v956 = vadd.f32 %v940, 0.3
    %v957 = vmax.f32 %v941, 0.0
    %v958 = vmax.f32 %v942, 0.0
    %v959 = vmax.f32 %v943, 0.0
    %v960 = vmax.f32 %v944, 0.0
    %v961 = vmax.f32 %v945, 0.0
    %v962 = vmax.f32 %v946, 0.0
    %v963 = vmax.f32 %v947, 0.0
    %v964 = vmax.f32 %v948, 0.0
    %v965 = vmax.f32 %v949, 0.0
    %v966 = vmax.f32 %v950, 0.0
    %v967 = vmax.f32 %v951, 0.0
    %v968 = vmax.f32 %v952, 0.0
    %v969 = vmax.f32 %v953, 0.0
    %v970 = vmax.f32 %v954, 0.0
    %v971 = vmax.f32 %v955, 0.0
    %v972 = vmax.f32 %v956, 0.0
    %vm973 = vcmask 7168
    %974 = vst.msk [vmem:[%s6] sm:$0xff] %vm973, %v957
    %975 = vst.msk [vmem:[%s6 + $0x8] sm:$0xff] %vm973, %v958
    %976 = vst.msk [vmem:[%s6 + $0x10] sm:$0xff] %vm973, %v959
    %977 = vst.msk [vmem:[%s6 + $0x18] sm:$0xff] %vm973, %v960
    %978 = vst.msk [vmem:[%s6 + $0x20] sm:$0xff] %vm973, %v961
    %979 = vst.msk [vmem:[%s6 + $0x28] sm:$0xff] %vm973, %v962
    %980 = vst.msk [vmem:[%s6 + $0x30] sm:$0xff] %vm973, %v963
    %981 = vst.msk [vmem:[%s6 + $0x38] sm:$0xff] %vm973, %v964
    %982 = vst.msk [vmem:[%s6 + $0x40] sm:$0xff] %vm973, %v965
    %983 = vst.msk [vmem:[%s6 + $0x48] sm:$0xff] %vm973, %v966
    %984 = vst.msk [vmem:[%s6 + $0x50] sm:$0xff] %vm973, %v967
    %985 = vst.msk [vmem:[%s6 + $0x58] sm:$0xff] %vm973, %v968
    %986 = vst.msk [vmem:[%s6 + $0x60] sm:$0xff] %vm973, %v969
    %987 = vst.msk [vmem:[%s6 + $0x68] sm:$0xff] %vm973, %v970
    %988 = vst.msk [vmem:[%s6 + $0x70] sm:$0xff] %vm973, %v971
    %989 = vst.msk [vmem:[%s6 + $0x78] sm:$0xff] %vm973, %v972
  $region33: #{tpu_custom_call.1} parent=0 // pred_fallthru
    _
  // Predicated region
  $region34: #{tpu_custom_call.1} parent=0 // pred_check
    _
  $region35: #{tpu_custom_call.1} parent=0 // pred_check_branch
    %991 = sbr.rel (0) target = $region37
  $region36: #{tpu_custom_call.1} parent=0 // pred_region
    _
  $region37: #{tpu_custom_call.1} parent=0 // pred_fallthru
    _
  // Predicated region
  $region38: #{tpu_custom_call.1} parent=0 // pred_check
    _
  $region39: #{tpu_custom_call.1} parent=0 // pred_check_branch
    %993 = sbr.rel (0) target = $region41
  $region40: #{tpu_custom_call.1} parent=0 // pred_region
    _
  $region41: #{tpu_custom_call.1} parent=0 // pred_fallthru
    _

</llo_original>
